<compile_context>
chip_gen: v5e
topology: v5e:2x2
jax: 0.10.0
libtpu: 0.0.40
codegen_flags: <defaults>
</compile_context>

<pallas_src>
import functools

import jax
import jax.numpy as jnp
import numpy as np
from jax import lax
from jax.experimental import pallas as pl
from jax.experimental.pallas import tpu as pltpu

EPS = 1e-5


def _round_up(n, m):
    return ((n + m - 1) // m) * m


# ---------------------------------------------------------------------------
# Pallas kernels
# ---------------------------------------------------------------------------
def _mm_stats_kernel(x_ref, w_ref, y_ref, stats_ref):
    """1x1 conv tile: (tile, Cin) @ (Cin, Cout) + per-tile sum / sum-of-sq.

    Weights arrive pre-cast to bf16; the MXU accumulates in f32.  Stats are
    emitted per tile (partial sums), so the grid axis is fully parallel.
    y is written back in bf16 to halve HBM traffic of the intermediate.
    """
    y = jnp.dot(x_ref[...].astype(jnp.bfloat16), w_ref[...],
                preferred_element_type=jnp.float32)
    y_ref[...] = y.astype(y_ref.dtype)
    stats_ref[0:1, :] = jnp.sum(y, axis=0, keepdims=True)
    stats_ref[1:2, :] = jnp.sum(y * y, axis=0, keepdims=True)


def _bn_relu_kernel(y_ref, stats_ref, g_ref, b_ref, o_ref, *, inv_n):
    """Training-mode BatchNorm (from reduced global stats) + ReLU per tile."""
    mean = stats_ref[0:1, :] * inv_n                       # (1, Cout)
    var = stats_ref[1:2, :] * inv_n - mean * mean          # one-pass variance
    yv = y_ref[...].astype(jnp.float32)
    yhat = (yv - mean) * lax.rsqrt(var + EPS)
    o_ref[...] = jnp.maximum(yhat * g_ref[...] + b_ref[...],
                             0.0).astype(o_ref.dtype)


def _bn_relu_mm_bias_kernel(y_ref, stats_ref, g_ref, b_ref, w2_ref, bias2_ref,
                            o_ref, *, inv_n):
    """Head tail: BN + ReLU + second 1x1 conv (bias), fused per tile.

    w2/bias2 are zero-padded to a 128-lane output so stores are unmasked.
    """
    mean = stats_ref[0:1, :] * inv_n
    var = stats_ref[1:2, :] * inv_n - mean * mean
    yv = y_ref[...].astype(jnp.float32)
    h = jnp.maximum((yv - mean) * lax.rsqrt(var + EPS) * g_ref[...]
                    + b_ref[...], 0.0)
    o_ref[...] = (jnp.dot(h.astype(jnp.bfloat16), w2_ref[...],
                          preferred_element_type=jnp.float32)
                  + bias2_ref[...])


def _xcorr_kernel(s_ref, k_ref, o_ref, stage_ref):
    """Depthwise cross-correlation, one (batch, row-block) grid step.

    s: (Hs, Ws, C) resident across row blocks, k: (Hk, Wk, C),
    o: (rb, Wo, C) — channels on lanes.  The width (sublane) shift is staged
    once per dj into VMEM; the tap loop then does only aligned loads + f32
    FMAs into a small register accumulator.
    """
    Hk, Wk, _ = k_ref.shape
    rb, Wo, C = o_ref.shape
    L = rb + Hk - 1
    r0 = pl.program_id(1) * rb

    # Stage Wk width-shifted, row-windowed copies of the search features.
    # The misaligned dj shift is paid Wk times here instead of Hk*Wk times
    # inside the tap loop.
    for dj in range(Wk):
        stage_ref[dj] = s_ref[pl.ds(r0, L), dj:dj + Wo, :]

    acc = jnp.zeros((rb, Wo, C), jnp.float32)
    for di in range(Hk):
        for dj in range(Wk):
            tap = k_ref[di, dj:dj + 1, :].astype(jnp.float32)          # (1, C)
            acc = acc + stage_ref[dj, di:di + rb, :, :].astype(jnp.float32) * tap
    o_ref[...] = acc.astype(o_ref.dtype)


# ---------------------------------------------------------------------------
# pallas_call wrappers
# ---------------------------------------------------------------------------
def _mm_with_stats(x2d, w_bf16, *, tile):
    """Shared pass 1: tiled matmul with per-tile stats, reduced in wrapper."""
    N, Cin = x2d.shape
    Cout = w_bf16.shape[1]
    tile = min(tile, _round_up(N, 8))
    Np = _round_up(N, tile)
    if Np != N:
        x2d = jnp.pad(x2d, ((0, Np - N), (0, 0)))   # zero rows: no stat impact
    nt = Np // tile

    y, stats_p = pl.pallas_call(
        _mm_stats_kernel,
        out_shape=(jax.ShapeDtypeStruct((Np, Cout), jnp.bfloat16),
                   jax.ShapeDtypeStruct((nt, 2, Cout), jnp.float32)),
        grid=(nt,),
        in_specs=[pl.BlockSpec((tile, Cin), lambda i: (i, 0)),
                  pl.BlockSpec((Cin, Cout), lambda i: (0, 0))],
        out_specs=(pl.BlockSpec((tile, Cout), lambda i: (i, 0)),
                   pl.BlockSpec((None, 2, Cout), lambda i: (i, 0, 0))),
        compiler_params=pltpu.CompilerParams(
            dimension_semantics=("parallel",)),
    )(x2d, w_bf16)
    stats = stats_p.sum(axis=0)                      # tiny (2, Cout) reduction
    return y, stats, Np, nt, tile


def conv_bn_relu(x2d, w_bf16, gamma, beta, *, tile=512):
    """Conv1x1 (no bias) + BatchNorm(train stats) + ReLU on (N, Cin) pixels."""
    N = x2d.shape[0]
    Cout = w_bf16.shape[1]
    y, stats, Np, nt, tile = _mm_with_stats(x2d, w_bf16, tile=tile)

    out = pl.pallas_call(
        functools.partial(_bn_relu_kernel, inv_n=1.0 / float(N)),
        out_shape=jax.ShapeDtypeStruct((Np, Cout), jnp.bfloat16),
        grid=(nt,),
        in_specs=[pl.BlockSpec((tile, Cout), lambda i: (i, 0)),
                  pl.BlockSpec((2, Cout), lambda i: (0, 0)),
                  pl.BlockSpec((1, Cout), lambda i: (0, 0)),
                  pl.BlockSpec((1, Cout), lambda i: (0, 0))],
        out_specs=pl.BlockSpec((tile, Cout), lambda i: (i, 0)),
        compiler_params=pltpu.CompilerParams(
            dimension_semantics=("parallel",)),
    )(y, stats, gamma, beta)
    return out[:N]


def head_apply(f2d, w1_bf16, g1, b1, w2p_bf16, bias2p, out_channels, *,
               tile=512):
    """Head: Conv1x1 + BN + ReLU + Conv1x1(bias, lane-padded) on pixels."""
    N, hidden = f2d.shape
    Cout_p = w2p_bf16.shape[1]
    y, stats, Np, nt, tile = _mm_with_stats(f2d, w1_bf16, tile=tile)

    out = pl.pallas_call(
        functools.partial(_bn_relu_mm_bias_kernel, inv_n=1.0 / float(N)),
        out_shape=jax.ShapeDtypeStruct((Np, Cout_p), jnp.float32),
        grid=(nt,),
        in_specs=[pl.BlockSpec((tile, hidden), lambda i: (i, 0)),
                  pl.BlockSpec((2, hidden), lambda i: (0, 0)),
                  pl.BlockSpec((1, hidden), lambda i: (0, 0)),
                  pl.BlockSpec((1, hidden), lambda i: (0, 0)),
                  pl.BlockSpec((hidden, Cout_p), lambda i: (0, 0)),
                  pl.BlockSpec((1, Cout_p), lambda i: (0, 0))],
        out_specs=pl.BlockSpec((tile, Cout_p), lambda i: (i, 0)),
        compiler_params=pltpu.CompilerParams(
            dimension_semantics=("parallel",)),
    )(y, stats, g1, b1, w2p_bf16, bias2p)
    return out[:N, :out_channels]


def xcorr_depthwise(search, kernel, *, row_block=4):
    """search: (B, Hs, Ws, C)  kernel: (B, Hk, Wk, C)  ->  bf16 (B, Ho, Wo, C)."""
    B, Hs, Ws, C = search.shape
    _, Hk, Wk, _ = kernel.shape
    Ho, Wo = Hs - Hk + 1, Ws - Wk + 1
    rb = min(row_block, Ho)
    while Ho % rb:            # pick a divisor of Ho so no edge block is needed
        rb -= 1
    nrb = Ho // rb
    L = rb + Hk - 1

    return pl.pallas_call(
        _xcorr_kernel,
        out_shape=jax.ShapeDtypeStruct((B, Ho, Wo, C), jnp.bfloat16),
        grid=(B, nrb),
        in_specs=[pl.BlockSpec((None, Hs, Ws, C), lambda b, r: (b, 0, 0, 0)),
                  pl.BlockSpec((None, Hk, Wk, C), lambda b, r: (b, 0, 0, 0))],
        out_specs=pl.BlockSpec((None, rb, Wo, C), lambda b, r: (b, r, 0, 0)),
        scratch_shapes=[pltpu.VMEM((Wk, L, Wo, C), search.dtype)],
        compiler_params=pltpu.CompilerParams(
            dimension_semantics=("parallel", "parallel")),
    )(search, kernel)


# ---------------------------------------------------------------------------
# Module
# ---------------------------------------------------------------------------
class DepthwiseXCorrPallas:
    def __init__(self, in_channels, hidden, out_channels,
                 kernel_size=1, head_kernel_size=1, padding=0, seed=42):
        assert kernel_size == 1 and head_kernel_size == 1, \
            "only the default 1x1 conv kernel sizes are implemented"
        self.hidden = hidden
        self.out_channels = out_channels
        self.padding = padding

        ks = jax.random.split(jax.random.PRNGKey(seed), 11)
        n = lambda k, s, sc=0.1: sc * jax.random.normal(k, s, jnp.float32)
        # conv_kernel branch: Conv2d(in->hidden, 1x1, no bias) + BN + ReLU
        # weights stored channels-last friendly: (Cin, Cout); gamma/beta (1, C)
        self.w_k = n(ks[0], (in_channels, hidden))
        self.g_k = 1.0 + n(ks[1], (1, hidden))
        self.b_k = n(ks[2], (1, hidden))
        # conv_search branch
        self.w_s = n(ks[3], (in_channels, hidden))
        self.g_s = 1.0 + n(ks[4], (1, hidden))
        self.b_s = n(ks[5], (1, hidden))
        # head: Conv2d(hidden->hidden,1x1,no bias)+BN+ReLU+Conv2d(hidden->out,1x1,bias)
        self.w_h1 = n(ks[6], (hidden, hidden))
        self.g_h1 = 1.0 + n(ks[7], (1, hidden))
        self.b_h1 = n(ks[8], (1, hidden))
        self.w_h2 = n(ks[9], (hidden, out_channels))
        self.bias_h2 = n(ks[10], (1, out_channels))

        # Kernel-side parameter copies: bf16 weights (pre-cast once) and the
        # lane-padded (128-wide) head output weight/bias.
        self.w_k_bf = self.w_k.astype(jnp.bfloat16)
        self.w_s_bf = self.w_s.astype(jnp.bfloat16)
        self.w_h1_bf = self.w_h1.astype(jnp.bfloat16)
        cout_p = _round_up(out_channels, 128)
        self.w_h2_p = jnp.zeros((hidden, cout_p), jnp.bfloat16).at[
            :, :out_channels].set(self.w_h2.astype(jnp.bfloat16))
        self.bias_h2_p = jnp.zeros((1, cout_p), jnp.float32).at[
            :, :out_channels].set(self.bias_h2)

    def __call__(self, kernel_nchw, search_nchw):
        B, Cin, Hk, Wk = kernel_nchw.shape
        _, _, Hs, Ws = search_nchw.shape
        hidden = self.hidden

        # single NCHW -> NHWC transpose per input; channels-last from here on
        k_nhwc = jnp.transpose(kernel_nchw, (0, 2, 3, 1))
        s_nhwc = jnp.transpose(search_nchw, (0, 2, 3, 1))

        kf = conv_bn_relu(k_nhwc.reshape(B * Hk * Wk, Cin),
                          self.w_k_bf, self.g_k, self.b_k)
        kf = kf.reshape(B, Hk, Wk, hidden)
        sf = conv_bn_relu(s_nhwc.reshape(B * Hs * Ws, Cin),
                          self.w_s_bf, self.g_s, self.b_s)
        sf = sf.reshape(B, Hs, Ws, hidden)

        if self.padding:
            p = self.padding
            sf = jnp.pad(sf, ((0, 0), (p, p), (p, p), (0, 0)))

        # depthwise cross-correlation (channels-last, bf16 features)
        feat = xcorr_depthwise(sf, kf)                    # (B, Ho, Wo, hidden)
        _, Ho, Wo, _ = feat.shape

        out = head_apply(feat.reshape(B * Ho * Wo, hidden),
                         self.w_h1_bf, self.g_h1, self.b_h1,
                         self.w_h2_p, self.bias_h2_p, self.out_channels)
        out = out.reshape(B, Ho, Wo, self.out_channels)
        return jnp.transpose(out, (0, 3, 1, 2))           # back to NCHW


# ---------------------------------------------------------------------------
# Pure-JAX reference (mirrors the kernel's bf16 rounding points so the
# comparison checks plumbing, not just tolerance)
# ---------------------------------------------------------------------------
def reference_forward(m, kernel, search):
    def q(x):   # bf16 storage between stages, upcast for compute
        return x.astype(jnp.bfloat16).astype(jnp.float32)

    def conv1x1(x_nchw, w_cin_cout):
        return jnp.einsum('co,bchw->bohw',
                          w_cin_cout.astype(jnp.bfloat16),
                          x_nchw.astype(jnp.bfloat16),
                          preferred_element_type=jnp.float32)

    def bn_relu(y, g, b):
        mean = y.mean(axis=(0, 2, 3), keepdims=True)
        var = ((y - mean) ** 2).mean(axis=(0, 2, 3), keepdims=True)
        yh = (q(y) - mean) * lax.rsqrt(var + EPS)    # y is stored bf16 between passes
        return jnp.maximum(yh * g.reshape(1, -1, 1, 1)
                           + b.reshape(1, -1, 1, 1), 0.0)

    kf = q(bn_relu(conv1x1(kernel, m.w_k), m.g_k, m.b_k))
    sf = q(bn_relu(conv1x1(search, m.w_s), m.g_s, m.b_s))
    B, C, Hk, Wk = kf.shape
    x = sf.reshape(1, B * C, sf.shape[2], sf.shape[3])
    filt = kf.reshape(B * C, 1, Hk, Wk)
    out = lax.conv_general_dilated(
        x, filt, window_strides=(1, 1),
        padding=[(m.padding, m.padding)] * 2,
        feature_group_count=B * C,
        dimension_numbers=('NCHW', 'OIHW', 'NCHW'),
        precision=lax.Precision.HIGHEST)
    feat = q(out.reshape(B, C, out.shape[2], out.shape[3]))

    y = bn_relu(conv1x1(feat, m.w_h1), m.g_h1, m.b_h1)
    return conv1x1(y, m.w_h2) + m.bias_h2.reshape(1, -1, 1, 1)


if __name__ == "__main__":
    B, Cin, hidden, out_ch = 2, 4, 32, 8
    Hs = Ws = 16     # search spatial
    Hk = Wk = 8      # template spatial

    key = jax.random.PRNGKey(0)
    k1, k2 = jax.random.split(key)
    kernel_in = jax.random.normal(k1, (B, Cin, Hk, Wk), jnp.float32)
    search_in = jax.random.normal(k2, (B, Cin, Hs, Ws), jnp.float32)

    model = DepthwiseXCorrPallas(Cin, hidden, out_ch)
    out = jax.block_until_ready(model(kernel_in, search_in))

    assert out.shape == (B, out_ch, Hs - Hk + 1, Ws - Wk + 1), out.shape
    ref = reference_forward(model, kernel_in, search_in)
    np.testing.assert_allclose(np.asarray(out), np.asarray(ref),
                               rtol=1e-2, atol=1e-2)

    print("KERNEL_OK")
</pallas_src>

<mosaic_0001>
module attributes {stable_mosaic.version = 11 : i64} {
  func.func @_mm_stats_kernel(%arg0: i32, %arg1: memref<128x4xf32, #tpu.memory_space<vmem>>, %arg2: memref<4x32xbf16, #tpu.memory_space<vmem>>, %arg3: memref<128x32xbf16, #tpu.memory_space<vmem>>, %arg4: memref<1x2x32xf32, #tpu.memory_space<vmem>>) attributes {dimension_semantics = [#tpu.dimension_semantics<parallel>], iteration_bounds = array<i64: 1>, scalar_prefetch = 0 : i64, scratch_operands = 0 : i64, tpu.core_type = #tpu.core_type<tc>, window_params = [{transform_indices = @transform_0, window_bounds = array<i64: 128, 4>}, {pipeline_mode = #tpu.pipeline_mode<synchronous>, transform_indices = @transform_1, window_bounds = array<i64: 4, 32>}, {transform_indices = @transform_2, window_bounds = array<i64: 128, 32>}, {transform_indices = @transform_3, window_bounds = array<i64: 1, 2, 32>}]} {
    %c0 = arith.constant 0 : index
    %c0_0 = arith.constant 0 : index
    %0 = vector.load %arg1[%c0, %c0_0] : memref<128x4xf32, #tpu.memory_space<vmem>>, vector<128x4xf32>
    %1 = arith.truncf %0 : vector<128x4xf32> to vector<128x4xbf16>
    %c0_1 = arith.constant 0 : index
    %c0_2 = arith.constant 0 : index
    %2 = vector.load %arg2[%c0_1, %c0_2] : memref<4x32xbf16, #tpu.memory_space<vmem>>, vector<4x32xbf16>
    %cst = arith.constant dense<0.000000e+00> : vector<128x32xf32>
    %3 = tpu.matmul %1, %2, %cst {dimension_numbers = #tpu.dot_dimension_numbers<[1], [0], [0], [1], [0, 0, 1, 1], [], []>} : vector<128x4xbf16>, vector<4x32xbf16>, vector<128x32xf32> -> vector<128x32xf32>
    %4 = arith.truncf %3 : vector<128x32xf32> to vector<128x32xbf16>
    %c0_3 = arith.constant 0 : index
    %c0_4 = arith.constant 0 : index
    %5 = vector.load %arg3[%c0_3, %c0_4] : memref<128x32xbf16, #tpu.memory_space<vmem>>, vector<128x32xbf16>
    tpu.vector_store %arg3[%c0_3, %c0_4], %4 {strides = array<i32>} : memref<128x32xbf16, #tpu.memory_space<vmem>>, vector<128x32xbf16>,
    %cst_5 = arith.constant dense<0.000000e+00> : vector<32xf32>
    %6 = vector.multi_reduction <add>, %3, %cst_5 [0] : vector<128x32xf32> to vector<32xf32>
    %7 = vector.shape_cast %6 : vector<32xf32> to vector<1x32xf32>
    %c0_6 = arith.constant 0 : index
    %c0_7 = arith.constant 0 : index
    %c0_8 = arith.constant 0 : index
    %8 = vector.load %arg4[%c0_6, %c0_7, %c0_8] : memref<1x2x32xf32, #tpu.memory_space<vmem>>, vector<1x1x32xf32>
    %9 = vector.shape_cast %8 : vector<1x1x32xf32> to vector<1x32xf32>
    %10 = vector.shape_cast %7 : vector<1x32xf32> to vector<1x1x32xf32>
    tpu.vector_store %arg4[%c0_6, %c0_7, %c0_8], %10 {strides = array<i32>} : memref<1x2x32xf32, #tpu.memory_space<vmem>>, vector<1x1x32xf32>,
    %11 = arith.mulf %3, %3 : vector<128x32xf32>
    %cst_9 = arith.constant dense<0.000000e+00> : vector<32xf32>
    %12 = vector.multi_reduction <add>, %11, %cst_9 [0] : vector<128x32xf32> to vector<32xf32>
    %13 = vector.shape_cast %12 : vector<32xf32> to vector<1x32xf32>
    %c0_10 = arith.constant 0 : index
    %c1 = arith.constant 1 : index
    %c0_11 = arith.constant 0 : index
    %14 = vector.load %arg4[%c0_10, %c1, %c0_11] : memref<1x2x32xf32, #tpu.memory_space<vmem>>, vector<1x1x32xf32>
    %15 = vector.shape_cast %14 : vector<1x1x32xf32> to vector<1x32xf32>
    %16 = vector.shape_cast %13 : vector<1x32xf32> to vector<1x1x32xf32>
    tpu.vector_store %arg4[%c0_10, %c1, %c0_11], %16 {strides = array<i32>} : memref<1x2x32xf32, #tpu.memory_space<vmem>>, vector<1x1x32xf32>,
    return
  }
  func.func @transform_0(%arg0: i32) -> (i32, i32) {
    %c0_i32 = arith.constant 0 : i32
    %c0_i32_0 = arith.constant 0 : i32
    return %arg0, %c0_i32 : i32, i32
  }
  func.func @transform_1(%arg0: i32) -> (i32, i32) {
    %c0_i32 = arith.constant 0 : i32
    %c0_i32_0 = arith.constant 0 : i32
    %c0_i32_1 = arith.constant 0 : i32
    return %c0_i32, %c0_i32_0 : i32, i32
  }
  func.func @transform_2(%arg0: i32) -> (i32, i32) {
    %c0_i32 = arith.constant 0 : i32
    %c0_i32_0 = arith.constant 0 : i32
    return %arg0, %c0_i32 : i32, i32
  }
  func.func @transform_3(%arg0: i32) -> (i32, i32, i32) {
    %c0_i32 = arith.constant 0 : i32
    %c0_i32_0 = arith.constant 0 : i32
    %c0_i32_1 = arith.constant 0 : i32
    return %arg0, %c0_i32, %c0_i32_0 : i32, i32, i32
  }
}

</mosaic_0001>

<llo_original>
// kernel: tpu_custom_call.1
$region0: #{tpu_custom_call.1}
  #allocation0 [shape = 'u32[]', space=smem, size = 0x4, offset = 0x4, fixed_abs, tag = 'smem constant byte address 0x4 - core index']
  #allocation1 [shape = 'u32[72,128]{1,0:T(1,128)}', space=vmem, size = 0x9000, scoped, tag = 'internal scratch']
  %s0 = inlined_call_operand.vmem [shape: f32[128,4], index: 0, kind: input, shape index: {}]
  %s1 = inlined_call_operand.vmem [shape: bf16[4,32], index: 1, kind: input, shape index: {}]
  %s2 = inlined_call_operand.vmem [shape: bf16[128,32], index: 2, kind: output, shape index: {0}]
  %s3 = inlined_call_operand.hbm [shape: f32[1,2,32], index: 3, kind: output, shape index: {1}]
  %4 = xla_tuple %s2, %s3
  %s5 = sld [smem:[#allocation0]]
  $region26: #{tpu_custom_call.1} parent=0
    _
  %s7 = ssub.s32 1, %s5
  %s8 = scalar_select 0, %s7, %s5
  $region1: #{tpu_custom_call.1} parent=0
    #allocation2 [shape = 'u8[1024]{0}', space=vmem, size = 0x400, scoped, tag = 'output window, operand 1, single buffered']
    #allocation3 [shape = 's32[1]{0}', space=sflag, size = 0x4, scoped, tag = 'scoped memory for tpu_custom_call.1']
    %9 = vsyncpa [#allocation3], 0
    // Predicated region
    $region2: #{tpu_custom_call.1} parent=1 // pred_check
      _
    $region3: #{tpu_custom_call.1} parent=1 // pred_check_branch
      %11 = sbr.rel (0) target = $region5
    $region4: #{tpu_custom_call.1} parent=1 // pred_region
      _
    $region5: #{tpu_custom_call.1} parent=1 // pred_fallthru
      _
    // Predicated region
    $region6: #{tpu_custom_call.1} parent=1 // pred_check
      _
    $region7: #{tpu_custom_call.1} parent=1 // pred_check_branch
      %13 = sbr.rel (0) target = $region9
    $region8: #{tpu_custom_call.1} parent=1 // pred_region
      _
    $region9: #{tpu_custom_call.1} parent=1 // pred_fallthru
      _
    %v15 = vld [vmem:[%s0] sm:$0xff]
    %v16 = vld [vmem:[%s0 + $0x8] sm:$0xff]
    %v17 = vld [vmem:[%s0 + $0x10] sm:$0xff]
    %v18 = vld [vmem:[%s0 + $0x18] sm:$0xff]
    %v19 = vld [vmem:[%s0 + $0x20] sm:$0xff]
    %v20 = vld [vmem:[%s0 + $0x28] sm:$0xff]
    %v21 = vld [vmem:[%s0 + $0x30] sm:$0xff]
    %v22 = vld [vmem:[%s0 + $0x38] sm:$0xff]
    %v23 = vld [vmem:[%s0 + $0x40] sm:$0xff]
    %v24 = vld [vmem:[%s0 + $0x48] sm:$0xff]
    %v25 = vld [vmem:[%s0 + $0x50] sm:$0xff]
    %v26 = vld [vmem:[%s0 + $0x58] sm:$0xff]
    %v27 = vld [vmem:[%s0 + $0x60] sm:$0xff]
    %v28 = vld [vmem:[%s0 + $0x68] sm:$0xff]
    %v29 = vld [vmem:[%s0 + $0x70] sm:$0xff]
    %v30 = vld [vmem:[%s0 + $0x78] sm:$0xff]
    %v31 = vpack.c.bf16 %v16, %v15
    %v32 = vpack.c.bf16 %v18, %v17
    %v33 = vpack.c.bf16 %v20, %v19
    %v34 = vpack.c.bf16 %v22, %v21
    %v35 = vpack.c.bf16 %v24, %v23
    %v36 = vpack.c.bf16 %v26, %v25
    %v37 = vpack.c.bf16 %v28, %v27
    %v38 = vpack.c.bf16 %v30, %v29
    %v39 = vld [vmem:[%s1] sm:$0x3]
    %vm40 = vcmask 31744
    %v42 = vsel %vm40, %v31, 0
    %v45 = vsel %vm40, %v32, 0
    %v48 = vsel %vm40, %v33, 0
    %v51 = vsel %vm40, %v34, 0
    %v54 = vsel %vm40, %v35, 0
    %v57 = vsel %vm40, %v36, 0
    %v60 = vsel %vm40, %v37, 0
    %v63 = vsel %vm40, %v38, 0
    %vm65 = vcmask 1041408
    %v67 = vsel %vm65, %v39, 0
    %69 = vmatpush.bf16.msra.mxu0 0
    %70 = vmatpush.bf16.msra.mxu0 0
    %71 = vmatpush.bf16.msra.mxu0 0
    %72 = vmatpush.bf16.msra.mxu0 0
    %73 = vmatpush.bf16.msra.mxu0 0
    %74 = vmatpush.bf16.msra.mxu0 0
    %75 = vmatpush.bf16.msra.mxu0 0
    %76 = vmatpush.bf16.msra.mxu0 %v67
    %77 = vmatmul.bf16.gmra.mxu0 %v42
    %v78 = vpop.f32.mrf.mxu0
    %v79 = vadd.f32 0.0, %v78
    %v80 = vpop.f32.mrf.mxu0
    %v81 = vadd.f32 0.0, %v80
    %82 = vmatmul.bf16.gmra.mxu0 %v45
    %v83 = vpop.f32.mrf.mxu0
    %v84 = vadd.f32 0.0, %v83
    %v85 = vpop.f32.mrf.mxu0
    %v86 = vadd.f32 0.0, %v85
    %87 = vmatmul.bf16.gmra.mxu0 %v48
    %v88 = vpop.f32.mrf.mxu0
    %v89 = vadd.f32 0.0, %v88
    %v90 = vpop.f32.mrf.mxu0
    %v91 = vadd.f32 0.0, %v90
    %92 = vmatmul.bf16.gmra.mxu0 %v51
    %v93 = vpop.f32.mrf.mxu0
    %v94 = vadd.f32 0.0, %v93
    %v95 = vpop.f32.mrf.mxu0
    %v96 = vadd.f32 0.0, %v95
    %97 = vmatmul.bf16.gmra.mxu0 %v54
    %v98 = vpop.f32.mrf.mxu0
    %v99 = vadd.f32 0.0, %v98
    %v100 = vpop.f32.mrf.mxu0
    %v101 = vadd.f32 0.0, %v100
    %102 = vmatmul.bf16.gmra.mxu0 %v57
    %v103 = vpop.f32.mrf.mxu0
    %v104 = vadd.f32 0.0, %v103
    %v105 = vpop.f32.mrf.mxu0
    %v106 = vadd.f32 0.0, %v105
    %107 = vmatmul.bf16.gmra.mxu0 %v60
    %v108 = vpop.f32.mrf.mxu0
    %v109 = vadd.f32 0.0, %v108
    %v110 = vpop.f32.mrf.mxu0
    %v111 = vadd.f32 0.0, %v110
    %112 = vmatmul.bf16.gmra.mxu0 %v63
    %v113 = vpop.f32.mrf.mxu0
    %v114 = vadd.f32 0.0, %v113
    %v115 = vpop.f32.mrf.mxu0
    %v116 = vadd.f32 0.0, %v115
    %117 = vdwg.mxu0
    %v118 = vpack.c.bf16 %v79, %v79
    %v119 = vpack.c.bf16 %v81, %v81
    %v120 = vpack.c.bf16 %v84, %v84
    %v121 = vpack.c.bf16 %v86, %v86
    %v122 = vpack.c.bf16 %v89, %v89
    %v123 = vpack.c.bf16 %v91, %v91
    %v124 = vpack.c.bf16 %v94, %v94
    %v125 = vpack.c.bf16 %v96, %v96
    %v126 = vpack.c.bf16 %v99, %v99
    %v127 = vpack.c.bf16 %v101, %v101
    %v128 = vpack.c.bf16 %v104, %v104
    %v129 = vpack.c.bf16 %v106, %v106
    %v130 = vpack.c.bf16 %v109, %v109
    %v131 = vpack.c.bf16 %v111, %v111
    %v132 = vpack.c.bf16 %v114, %v114
    %v133 = vpack.c.bf16 %v116, %v116
    %vm134 = vcmask 257024
    %135 = vst.msk [vmem:[%s2] sm:$0xf] %vm134, %v118
    %136 = vst.msk [vmem:[%s2 + $0x4] sm:$0xf] %vm134, %v119
    %137 = vst.msk [vmem:[%s2 + $0x8] sm:$0xf] %vm134, %v120
    %138 = vst.msk [vmem:[%s2 + $0xc] sm:$0xf] %vm134, %v121
    %139 = vst.msk [vmem:[%s2 + $0x10] sm:$0xf] %vm134, %v122
    %140 = vst.msk [vmem:[%s2 + $0x14] sm:$0xf] %vm134, %v123
    %141 = vst.msk [vmem:[%s2 + $0x18] sm:$0xf] %vm134, %v124
    %142 = vst.msk [vmem:[%s2 + $0x1c] sm:$0xf] %vm134, %v125
    %143 = vst.msk [vmem:[%s2 + $0x20] sm:$0xf] %vm134, %v126
    %144 = vst.msk [vmem:[%s2 + $0x24] sm:$0xf] %vm134, %v127
    %145 = vst.msk [vmem:[%s2 + $0x28] sm:$0xf] %vm134, %v128
    %146 = vst.msk [vmem:[%s2 + $0x2c] sm:$0xf] %vm134, %v129
    %147 = vst.msk [vmem:[%s2 + $0x30] sm:$0xf] %vm134, %v130
    %148 = vst.msk [vmem:[%s2 + $0x34] sm:$0xf] %vm134, %v131
    %149 = vst.msk [vmem:[%s2 + $0x38] sm:$0xf] %vm134, %v132
    %150 = vst.msk [vmem:[%s2 + $0x3c] sm:$0xf] %vm134, %v133
    %vm151 = vcmask 261120
    %v152 = vsel %vm151, %v79, 0.0
    %v153 = vsel %vm151, %v81, 0.0
    %v154 = vadd.f32 %v152, %v153
    %v155 = vsel %vm151, %v84, 0.0
    %v156 = vadd.f32 %v154, %v155
    %v157 = vsel %vm151, %v86, 0.0
    %v158 = vadd.f32 %v156, %v157
    %v159 = vsel %vm151, %v89, 0.0
    %v160 = vadd.f32 %v158, %v159
    %v161 = vsel %vm151, %v91, 0.0
    %v162 = vadd.f32 %v160, %v161
    %v163 = vsel %vm151, %v94, 0.0
    %v164 = vadd.f32 %v162, %v163
    %v165 = vsel %vm151, %v96, 0.0
    %v166 = vadd.f32 %v164, %v165
    %v167 = vsel %vm151, %v99, 0.0
    %v168 = vadd.f32 %v166, %v167
    %v169 = vsel %vm151, %v101, 0.0
    %v170 = vadd.f32 %v168, %v169
    %v171 = vsel %vm151, %v104, 0.0
    %v172 = vadd.f32 %v170, %v171
    %v173 = vsel %vm151, %v106, 0.0
    %v174 = vadd.f32 %v172, %v173
    %v175 = vsel %vm151, %v109, 0.0
    %v176 = vadd.f32 %v174, %v175
    %v177 = vsel %vm151, %v111, 0.0
    %v178 = vadd.f32 %v176, %v177
    %v179 = vsel %vm151, %v114, 0.0
    %v180 = vadd.f32 %v178, %v179
    %v181 = vsel %vm151, %v116, 0.0
    %v182 = vadd.f32 %v180, %v181
    %v183 = vrot.slane %v182, 4
    %v184 = vadd.f32 %v182, %v183
    %v185 = vrot.slane %v184, 2
    %v186 = vadd.f32 %v184, %v185
    %v187 = vrot.slane %v186, 1
    %v188 = vadd.f32 %v186, %v187
    %vm189 = vcmask 253952
    %190 = vst.msk [vmem:[#allocation2] sm:$0x1] %vm189, %v188
    %v191 = vmul.f32 %v79, %v79
    %v192 = vmul.f32 %v81, %v81
    %v193 = vmul.f32 %v84, %v84
    %v194 = vmul.f32 %v86, %v86
    %v195 = vmul.f32 %v89, %v89
    %v196 = vmul.f32 %v91, %v91
    %v197 = vmul.f32 %v94, %v94
    %v198 = vmul.f32 %v96, %v96
    %v199 = vmul.f32 %v99, %v99
    %v200 = vmul.f32 %v101, %v101
    %v201 = vmul.f32 %v104, %v104
    %v202 = vmul.f32 %v106, %v106
    %v203 = vmul.f32 %v109, %v109
    %v204 = vmul.f32 %v111, %v111
    %v205 = vmul.f32 %v114, %v114
    %v206 = vmul.f32 %v116, %v116
    %v207 = vsel %vm151, %v191, 0.0
    %v208 = vsel %vm151, %v192, 0.0
    %v209 = vadd.f32 %v207, %v208
    %v210 = vsel %vm151, %v193, 0.0
    %v211 = vadd.f32 %v209, %v210
    %v212 = vsel %vm151, %v194, 0.0
    %v213 = vadd.f32 %v211, %v212
    %v214 = vsel %vm151, %v195, 0.0
    %v215 = vadd.f32 %v213, %v214
    %v216 = vsel %vm151, %v196, 0.0
    %v217 = vadd.f32 %v215, %v216
    %v218 = vsel %vm151, %v197, 0.0
    %v219 = vadd.f32 %v217, %v218
    %v220 = vsel %vm151, %v198, 0.0
    %v221 = vadd.f32 %v219, %v220
    %v222 = vsel %vm151, %v199, 0.0
    %v223 = vadd.f32 %v221, %v222
    %v224 = vsel %vm151, %v200, 0.0
    %v225 = vadd.f32 %v223, %v224
    %v226 = vsel %vm151, %v201, 0.0
    %v227 = vadd.f32 %v225, %v226
    %v228 = vsel %vm151, %v202, 0.0
    %v229 = vadd.f32 %v227, %v228
    %v230 = vsel %vm151, %v203, 0.0
    %v231 = vadd.f32 %v229, %v230
    %v232 = vsel %vm151, %v204, 0.0
    %v233 = vadd.f32 %v231, %v232
    %v234 = vsel %vm151, %v205, 0.0
    %v235 = vadd.f32 %v233, %v234
    %v236 = vsel %vm151, %v206, 0.0
    %v237 = vadd.f32 %v235, %v236
    %v238 = vrot.slane %v237, 4
    %v239 = vadd.f32 %v237, %v238
    %v240 = vrot.slane %v239, 2
    %v241 = vadd.f32 %v239, %v240
    %v242 = vrot.slane %v241, 1
    %v243 = vadd.f32 %v241, %v242
    %244 = vst.msk [vmem:[#allocation2 + $0x1] sm:$0x1] %vm189, %v243
    // Predicated region
    $region10: #{tpu_custom_call.1} parent=1 // pred_check
      _
    $region11: #{tpu_custom_call.1} parent=1 // pred_check_branch
      %246 = sbr.rel (0) target = $region13
    $region12: #{tpu_custom_call.1} parent=1 // pred_region
      _
    $region13: #{tpu_custom_call.1} parent=1 // pred_fallthru
      _
    // Predicated region
    $region14: #{tpu_custom_call.1} parent=1 // pred_check
      _
    $region15: #{tpu_custom_call.1} parent=1 // pred_check_branch
      %248 = sbr.rel (0) target = $region17
    $region16: #{tpu_custom_call.1} parent=1 // pred_region
      %250 = vsyncadd [#allocation3], 0
      %s252 = sshll.u32 [#allocation2], 4
      %s253 = int_to_ptr.vmem [resolvable:$true] %s252
      %s254 = sshll.u32 %s3, 4
      %s255 = int_to_ptr.hbm [resolvable:$true] %s254
      %257 = dma.vmem_to_hbm [thread:$0]  %s253, 32, %s255, [#allocation3]
    $region17: #{tpu_custom_call.1} parent=1 // pred_fallthru
      _
    // Predicated region
    $region18: #{tpu_custom_call.1} parent=1 // pred_check
      _
    $region19: #{tpu_custom_call.1} parent=1 // pred_check_branch
      %259 = sbr.rel (0) target = $region21
    $region20: #{tpu_custom_call.1} parent=1 // pred_region
      _
    $region21: #{tpu_custom_call.1} parent=1 // pred_fallthru
      _
    // Predicated region
    $region22: #{tpu_custom_call.1} parent=1 // pred_check
      _
    $region23: #{tpu_custom_call.1} parent=1 // pred_check_branch
      %261 = sbr.rel (0) target = $region25
    $region24: #{tpu_custom_call.1} parent=1 // pred_region
      %263 = dma.done [#allocation3], 32
    $region25: #{tpu_custom_call.1} parent=1 // pred_fallthru
      _
    %264 = vsyncpa [#allocation3], 1

</llo_original>
